<compile_context>
chip_gen: v7x
topology: tpu7x:2x2x1
jax: 0.10.0
libtpu: 0.0.40
codegen_flags: <defaults>
</compile_context>

<pallas_src>
import jax
import jax.numpy as jnp
from jax.experimental import pallas as pl
from jax.experimental.pallas import tpu as pltpu
import numpy as np


def _highway_kernel(x_ref, w_ref, b_ref, o_ref):
    x32 = x_ref[...].astype(jnp.float32)            # [tb, D] residual path, f32
    x_mx = x_ref[...].astype(w_ref.dtype)           # bf16 operand for the MXU
    D = x32.shape[-1]

    # One fused matmul: [tb, D] @ [D, 2D] -> [tb, 2D], f32 accumulate.
    tg = jnp.dot(x_mx, w_ref[...], preferred_element_type=jnp.float32) + b_ref[...]

    # Transform branch: relu(x @ Wt + bt)   (lane-aligned static slice)
    t = jnp.maximum(tg[:, :D], 0.0)

    # Gate branch: softmax(x @ Wg + bg) over the feature (lane) axis.
    g_logits = tg[:, D:]
    g_max = jnp.max(g_logits, axis=-1, keepdims=True)
    e = jnp.exp(g_logits - g_max)
    g = e * pl.reciprocal(jnp.sum(e, axis=-1, keepdims=True), approx=True)

    # Highway combine: t*g + x*(1-g) == x + g*(t - x)
    o_ref[...] = (x32 + g * (t - x32)).astype(o_ref.dtype)


def _round_up(n, m):
    return -(-n // m) * m


def _pick_rows(B, block_rows):
    # Biggest (8-sublane-aligned) row tile <= block_rows that still yields a
    # grid of >= 2 "parallel" blocks (keeps both v7x TensorCores busy).
    tb = min(block_rows, _round_up(max(B // 2, 1), 8))
    return max(tb, 8)


def highway_forward(x, w_transform, b_transform, w_gate, b_gate, *,
                    block_rows=512, mxu_dtype=jnp.bfloat16):
    """x: [B, D]; w_*: [D, D] in PyTorch (out, in) layout; b_*: [D]."""
    B, D = x.shape
    tb = _pick_rows(B, block_rows)
    grid = pl.cdiv(B, tb)                # ragged last block handled by Pallas

    # Pack both Linears into ONE pre-transposed weight [D, 2D] and bias [1, 2D].
    w = jnp.concatenate([w_transform.T, w_gate.T], axis=1).astype(mxu_dtype)
    b = jnp.concatenate([b_transform, b_gate]).reshape(1, 2 * D).astype(jnp.float32)

    # VMEM budget: x + out tiles double-buffered (f32), weights/bias single-buffered.
    vmem_est = (2 * 2 * tb * D * 4
                + D * (2 * D) * jnp.dtype(mxu_dtype).itemsize
                + (2 * D) * 4)
    vmem_limit = int(max(32 * 1024 * 1024, 4 * vmem_est))

    grid_spec = pltpu.PrefetchScalarGridSpec(
        num_scalar_prefetch=0,
        grid=(grid,),
        in_specs=[
            pl.BlockSpec((tb, D), lambda i: (i, 0)),
            pl.BlockSpec((D, 2 * D), lambda i: (0, 0),
                         pipeline_mode=pl.Buffered(1)),   # constant across grid
            pl.BlockSpec((1, 2 * D), lambda i: (0, 0),
                         pipeline_mode=pl.Buffered(1)),
        ],
        out_specs=pl.BlockSpec((tb, D), lambda i: (i, 0)),
    )
    return pl.pallas_call(
        _highway_kernel,
        out_shape=jax.ShapeDtypeStruct((B, D), x.dtype),
        grid_spec=grid_spec,
        compiler_params=pltpu.CompilerParams(
            dimension_semantics=("parallel",),
            vmem_limit_bytes=vmem_limit),
    )(x, w, b)


def highway_reference(x, w_transform, b_transform, w_gate, b_gate):
    """Pure-JAX mirror of the PyTorch forward (for verification)."""
    t = jax.nn.relu(x @ w_transform.T + b_transform)
    g = jax.nn.softmax(x @ w_gate.T + b_gate, axis=-1)
    return t * g + x * (1.0 - g)


if __name__ == "__main__":
    # input_size = 128 (lane-full), batch = 512 -> grid of 2 parallel 256-row tiles.
    B, D = 512, 128

    key = jax.random.PRNGKey(0)
    k_x, k_wt, k_bt, k_wg = jax.random.split(key, 4)
    x = jax.random.normal(k_x, (B, D), dtype=jnp.float32)

    # PyTorch-style uniform(-1/sqrt(D), 1/sqrt(D)) init for both Linears.
    bound = 1.0 / np.sqrt(D)
    w_transform = jax.random.uniform(k_wt, (D, D), jnp.float32, -bound, bound)
    b_transform = jax.random.uniform(k_bt, (D,), jnp.float32, -bound, bound)
    w_gate = jax.random.uniform(k_wg, (D, D), jnp.float32, -bound, bound)
    b_gate = jnp.zeros((D,), jnp.float32)     # gate_bias = 0 (bias.data.fill_(0))

    out = highway_forward(x, w_transform, b_transform, w_gate, b_gate)
    out = jax.block_until_ready(out)

    ref = highway_reference(x, w_transform, b_transform, w_gate, b_gate)
    # Tolerance loosened vs. the pure-f32 path because the MXU operands are bf16.
    np.testing.assert_allclose(np.asarray(out), np.asarray(ref),
                               rtol=2e-2, atol=2e-2)
    assert out.shape == (B, D)
    print("KERNEL_OK")
</pallas_src>

<mosaic_0001>
module attributes {stable_mosaic.version = 11 : i64} {
  func.func @_highway_kernel(%arg0: i32, %arg1: memref<256x128xf32, #tpu.memory_space<vmem>>, %arg2: memref<128x256xbf16, #tpu.memory_space<vmem>>, %arg3: memref<1x256xf32, #tpu.memory_space<vmem>>, %arg4: memref<256x128xf32, #tpu.memory_space<vmem>>) attributes {dimension_semantics = [#tpu.dimension_semantics<parallel>], iteration_bounds = array<i64: 2>, scalar_prefetch = 0 : i64, scratch_operands = 0 : i64, tpu.core_type = #tpu.core_type<tc>, window_params = [{transform_indices = @transform_0, window_bounds = array<i64: 256, 128>}, {pipeline_mode = #tpu.pipeline_mode<synchronous>, transform_indices = @transform_1, window_bounds = array<i64: 128, 256>}, {pipeline_mode = #tpu.pipeline_mode<synchronous>, transform_indices = @transform_2, window_bounds = array<i64: 1, 256>}, {transform_indices = @transform_3, window_bounds = array<i64: 256, 128>}]} {
    %c0 = arith.constant 0 : index
    %c0_0 = arith.constant 0 : index
    %0 = vector.load %arg1[%c0, %c0_0] : memref<256x128xf32, #tpu.memory_space<vmem>>, vector<256x128xf32>
    %c0_1 = arith.constant 0 : index
    %c0_2 = arith.constant 0 : index
    %1 = vector.load %arg1[%c0_1, %c0_2] : memref<256x128xf32, #tpu.memory_space<vmem>>, vector<256x128xf32>
    %2 = arith.truncf %1 : vector<256x128xf32> to vector<256x128xbf16>
    %c0_3 = arith.constant 0 : index
    %c0_4 = arith.constant 0 : index
    %3 = vector.load %arg2[%c0_3, %c0_4] : memref<128x256xbf16, #tpu.memory_space<vmem>>, vector<128x256xbf16>
    %cst = arith.constant dense<0.000000e+00> : vector<256x256xf32>
    %4 = tpu.matmul %2, %3, %cst {dimension_numbers = #tpu.dot_dimension_numbers<[1], [0], [0], [1], [0, 0, 1, 1], [], []>} : vector<256x128xbf16>, vector<128x256xbf16>, vector<256x256xf32> -> vector<256x256xf32>
    %c0_5 = arith.constant 0 : index
    %c0_6 = arith.constant 0 : index
    %5 = vector.load %arg3[%c0_5, %c0_6] : memref<1x256xf32, #tpu.memory_space<vmem>>, vector<1x256xf32>
    %6 = vector.broadcast %5 : vector<1x256xf32> to vector<256x256xf32>
    %7 = arith.addf %4, %6 : vector<256x256xf32>
    %8 = vector.extract_strided_slice %7 {offsets = [0, 0], sizes = [256, 128], strides = [1, 1]} : vector<256x256xf32> to vector<256x128xf32>
    %cst_7 = arith.constant 0.000000e+00 : f32
    %9 = vector.broadcast %cst_7 : f32 to vector<256x128xf32>
    %10 = arith.maximumf %8, %9 : vector<256x128xf32>
    %11 = vector.extract_strided_slice %7 {offsets = [0, 128], sizes = [256, 128], strides = [1, 1]} : vector<256x256xf32> to vector<256x128xf32>
    %cst_8 = arith.constant dense<0xFF800000> : vector<256xf32>
    %12 = vector.multi_reduction <maximumf>, %11, %cst_8 [1] : vector<256x128xf32> to vector<256xf32>
    %13 = vector.shape_cast %12 : vector<256xf32> to vector<256x1xf32>
    %14 = vector.broadcast %13 : vector<256x1xf32> to vector<256x128xf32>
    %15 = arith.subf %11, %14 : vector<256x128xf32>
    %16 = math.exp %15 : vector<256x128xf32>
    %cst_9 = arith.constant dense<0.000000e+00> : vector<256xf32>
    %17 = vector.multi_reduction <add>, %16, %cst_9 [1] : vector<256x128xf32> to vector<256xf32>
    %18 = vector.shape_cast %17 : vector<256xf32> to vector<256x1xf32>
    %19 = tpu.reciprocal %18 {approx = true} : vector<256x1xf32> -> vector<256x1xf32>
    %20 = vector.broadcast %19 : vector<256x1xf32> to vector<256x128xf32>
    %21 = arith.mulf %16, %20 : vector<256x128xf32>
    %22 = arith.subf %10, %0 : vector<256x128xf32>
    %23 = arith.mulf %21, %22 : vector<256x128xf32>
    %24 = arith.addf %0, %23 : vector<256x128xf32>
    %c0_10 = arith.constant 0 : index
    %c0_11 = arith.constant 0 : index
    %25 = vector.load %arg4[%c0_10, %c0_11] : memref<256x128xf32, #tpu.memory_space<vmem>>, vector<256x128xf32>
    tpu.vector_store %arg4[%c0_10, %c0_11], %24 {strides = array<i32>} : memref<256x128xf32, #tpu.memory_space<vmem>>, vector<256x128xf32>,
    return
  }
  func.func @transform_0(%arg0: i32) -> (i32, i32) {
    %c0_i32 = arith.constant 0 : i32
    %c0_i32_0 = arith.constant 0 : i32
    return %arg0, %c0_i32 : i32, i32
  }
  func.func @transform_1(%arg0: i32) -> (i32, i32) {
    %c0_i32 = arith.constant 0 : i32
    %c0_i32_0 = arith.constant 0 : i32
    %c0_i32_1 = arith.constant 0 : i32
    return %c0_i32, %c0_i32_0 : i32, i32
  }
  func.func @transform_2(%arg0: i32) -> (i32, i32) {
    %c0_i32 = arith.constant 0 : i32
    %c0_i32_0 = arith.constant 0 : i32
    %c0_i32_1 = arith.constant 0 : i32
    return %c0_i32, %c0_i32_0 : i32, i32
  }
  func.func @transform_3(%arg0: i32) -> (i32, i32) {
    %c0_i32 = arith.constant 0 : i32
    %c0_i32_0 = arith.constant 0 : i32
    return %arg0, %c0_i32 : i32, i32
  }
}

</mosaic_0001>

<llo_original>
// kernel: tpu_custom_call.1
$region0: #{tpu_custom_call.1}
  #allocation0 [shape = 'u32[]', space=smem, size = 0x4, offset = 0x4, fixed_abs, tag = 'smem constant byte address 0x4 - core index']
  #allocation1 [shape = 'u32[144,128]{1,0:T(1,128)}', space=vmem, size = 0x12000, scoped, tag = 'internal scratch']
  %s0 = inlined_call_operand.hbm [shape: f32[512,128], index: 0, kind: input, shape index: {}]
  %s1 = inlined_call_operand.hbm [shape: bf16[128,256], index: 1, kind: input, shape index: {}]
  %s2 = inlined_call_operand.vmem [shape: f32[1,256], index: 2, kind: input, shape index: {}]
  %s3 = inlined_call_operand.hbm [shape: f32[512,128], index: 3, kind: output, shape index: {}]
  %s4 = sld [smem:[#allocation0]]
  $region53: #{tpu_custom_call.1} parent=0
    _
  %s6 = ssub.s32 1, %s4
  %s7 = scalar_select 0, %s6, %s4
  $region1: #{tpu_custom_call.1} parent=0
    #allocation2 [shape = 'u8[262144]{0}', space=vmem, size = 0x40000, scoped, tag = 'input window, operand 0']
    #allocation3 [shape = 's32[2]{0}', space=sflag, size = 0x8, scoped, tag = 'scoped memory for tpu_custom_call.1']
    #allocation4 [shape = 's32[2]{0}', space=sflag, size = 0x8, scoped, tag = 'scoped memory for tpu_custom_call.1']
    #allocation5 [shape = 'u8[65536]{0}', space=vmem, size = 0x10000, scoped, tag = 'input window, operand 1, single buffered']
    #allocation6 [shape = 's32[1]{0}', space=sflag, size = 0x4, scoped, tag = 'scoped memory for tpu_custom_call.1']
    #allocation7 [shape = 'u8[262144]{0}', space=vmem, size = 0x40000, scoped, tag = 'output window, operand 0']
    %8 = vsyncpa [#allocation3], 0
    %s9 = scalar_lea.sflag [#allocation3], 1
    %10 = vsyncpa %s9, 0
    %11 = vsyncpa [#allocation6], 0
    %12 = vsyncpa [#allocation4], 0
    %s13 = scalar_lea.sflag [#allocation4], 1
    %14 = vsyncpa %s13, 0
    loop: start=0, step=1, limit=4
    $region2: #{tpu_custom_call.1} parent=1 // loop_pre_header
      _
    $region3: #{tpu_custom_call.1} parent=1 // loop_header
      %s16 = sphi 0, %s20
      %p17 = scmp.ge.s32.totalorder %s16, 4
      %s26 = sphi 0, %s28
      %s29 = sphi 0, %s26
      %s30 = sphi 0, %s29
      %s46 = sphi 0, %s30
      %s50 = sphi 0, %s50
      %s52 = sphi 0, %s50
      %s53 = sphi 0, %s52
      %s67 = sphi 0, %s53
      %s71 = sphi 0, %s71
      %s73 = sphi 0, %s71
      %s74 = sphi 0, %s73
      %s88 = sphi 0, %s74
      %s94 = sphi 0, %s96
      %s97 = sphi 0, %s94
      %s98 = sphi 0, %s97
      %s114 = sphi 0, %s98
    $region4: #{tpu_custom_call.1} parent=1 // loop_header_branch
      %19 = sbr.rel (%p17) target = $region8
    $region5: #{tpu_custom_call.1} parent=1 // loop_body
      %s21 = ssub.s32 %s16, 1
      %s22 = ssub.s32 %s16, 2
      %s23 = sadd.s32 %s16, 1
      %s24 = ssub.s32 %s16, %s23
      %p25 = scmp.eq.s32.totalorder %s24, 0
      %s27 = sadd.s32 %s26, 1
      %s28 = scalar_select %p25, %s26, %s27
      %p31 = pneg %p25
      %p32 = scmp.eq.s32.totalorder %s16, 1
      %p33 = por %p31, %p32
      %p34 = scmp.ne.s32.totalorder %s26, %s29
      %p35 = scmp.eq.s32.totalorder %s16, 0
      %p36 = por %p34, %p35
      %p37 = scmp.ne.s32.totalorder %s26, %s29
      %p38 = scmp.eq.s32.totalorder %s21, 1
      %p39 = por %p37, %p38
      %p40 = scmp.ne.s32.totalorder %s29, %s30
      %p41 = scmp.eq.s32.totalorder %s21, 0
      %p42 = por %p40, %p41
      %p43 = scmp.ne.s32.totalorder %s29, %s30
      %p44 = scmp.eq.s32.totalorder %s22, 1
      %p45 = por %p43, %p44
      %p47 = scmp.ne.s32.totalorder %s30, %s46
      %p48 = scmp.eq.s32.totalorder %s22, 0
      %p49 = por %p47, %p48
      %s51 = sadd.s32 %s50, 1
      %p54 = scmp.eq.s32.totalorder %s16, 1
      %p55 = scmp.ne.s32.totalorder %s50, %s52
      %p56 = scmp.eq.s32.totalorder %s16, 0
      %p57 = por %p55, %p56
      %p58 = scmp.ne.s32.totalorder %s50, %s52
      %p59 = scmp.eq.s32.totalorder %s21, 1
      %p60 = por %p58, %p59
      %p61 = scmp.ne.s32.totalorder %s52, %s53
      %p62 = scmp.eq.s32.totalorder %s21, 0
      %p63 = por %p61, %p62
      %p64 = scmp.ne.s32.totalorder %s52, %s53
      %p65 = scmp.eq.s32.totalorder %s22, 1
      %p66 = por %p64, %p65
      %p68 = scmp.ne.s32.totalorder %s53, %s67
      %p69 = scmp.eq.s32.totalorder %s22, 0
      %p70 = por %p68, %p69
      %s72 = sadd.s32 %s71, 1
      %p75 = scmp.eq.s32.totalorder %s16, 1
      %p76 = scmp.ne.s32.totalorder %s71, %s73
      %p77 = scmp.eq.s32.totalorder %s16, 0
      %p78 = por %p76, %p77
      %p79 = scmp.ne.s32.totalorder %s71, %s73
      %p80 = scmp.eq.s32.totalorder %s21, 1
      %p81 = por %p79, %p80
      %p82 = scmp.ne.s32.totalorder %s73, %s74
      %p83 = scmp.eq.s32.totalorder %s21, 0
      %p84 = por %p82, %p83
      %p85 = scmp.ne.s32.totalorder %s73, %s74
      %p86 = scmp.eq.s32.totalorder %s22, 1
      %p87 = por %p85, %p86
      %p89 = scmp.ne.s32.totalorder %s74, %s88
      %p90 = scmp.eq.s32.totalorder %s22, 0
      %p91 = por %p89, %p90
      %s92 = ssub.s32 %s16, %s23
      %p93 = scmp.eq.s32.totalorder %s92, 0
      %s95 = sadd.s32 %s94, 1
      %s96 = scalar_select %p93, %s94, %s95
      %p99 = pneg %p93
      %p100 = scmp.eq.s32.totalorder %s16, 1
      %p101 = por %p99, %p100
      %p102 = scmp.ne.s32.totalorder %s94, %s97
      %p103 = scmp.eq.s32.totalorder %s16, 0
      %p104 = por %p102, %p103
      %p105 = scmp.ne.s32.totalorder %s94, %s97
      %p106 = scmp.eq.s32.totalorder %s21, 1
      %p107 = por %p105, %p106
      %p108 = scmp.ne.s32.totalorder %s97, %s98
      %p109 = scmp.eq.s32.totalorder %s21, 0
      %p110 = por %p108, %p109
      %p111 = scmp.ne.s32.totalorder %s97, %s98
      %p112 = scmp.eq.s32.totalorder %s22, 1
      %p113 = por %p111, %p112
      %p115 = scmp.ne.s32.totalorder %s98, %s114
      %p116 = scmp.eq.s32.totalorder %s22, 0
      %p117 = por %p115, %p116
      %p118 = scmp.le.s32.totalorder 1, %s16
      %p119 = scmp.lt.s32.totalorder %s16, 3
      %p120 = pnand %p118, %p119
      %p121 = pneg %p120
      // Predicated region
      $region9: #{tpu_custom_call.1} parent=5 // pred_check
        _
      $region10: #{tpu_custom_call.1} parent=5 // pred_check_branch
        %123 = sbr.rel (%p120) target = $region12
      $region11: #{tpu_custom_call.1} parent=5 // pred_region
        %s124 = ssub.s32 %s16, 1
        // Predicated region
        $region13: #{tpu_custom_call.1} parent=11 // pred_check
          %p125 = pneg %p63
        $region14: #{tpu_custom_call.1} parent=11 // pred_check_branch
          %127 = sbr.rel (%p125) target = $region16
        $region15: #{tpu_custom_call.1} parent=11 // pred_region
          %s129 = ssub.s32 2048, 2048
          %130 = vsyncadd [#allocation6], %s129
          %s131 = sshll.u32 [#allocation5], 4
          %s132 = int_to_ptr.vmem [resolvable:$true] %s131
          %137 = dma.hbm_to_vmem [thread:$0]  %s1, 2048, %s132, [#allocation6], 128, 128, 8
        $region16: #{tpu_custom_call.1} parent=11 // pred_fallthru
          _
        // Predicated region
        $region17: #{tpu_custom_call.1} parent=11 // pred_check
          %p138 = pneg %p84
        $region18: #{tpu_custom_call.1} parent=11 // pred_check_branch
          %140 = sbr.rel (%p138) target = $region20
        $region19: #{tpu_custom_call.1} parent=11 // pred_region
          _
        $region20: #{tpu_custom_call.1} parent=11 // pred_fallthru
          _
      $region12: #{tpu_custom_call.1} parent=5 // pred_fallthru
        _
      %p141 = scmp.lt.s32.totalorder %s16, 2
      // Predicated region
      $region21: #{tpu_custom_call.1} parent=5 // pred_check
        %p142 = pneg %p141
      $region22: #{tpu_custom_call.1} parent=5 // pred_check_branch
        %144 = sbr.rel (%p142) target = $region24
      $region23: #{tpu_custom_call.1} parent=5 // pred_region
        // Predicated region
        $region25: #{tpu_custom_call.1} parent=23 // pred_check
          %p145 = pneg %p36
        $region26: #{tpu_custom_call.1} parent=23 // pred_check_branch
          %147 = sbr.rel (%p145) target = $region28
        $region27: #{tpu_custom_call.1} parent=23 // pred_region
          %s148 = sand.u32 %s26, 1
          %s149 = scalar_lea.sflag [#allocation3], %s148
          %s150 = sand.u32 %s26, 1
          %s151 = smul.addr %s150, 256
          %s152 = scalar_lea.vmem [#allocation2], %s151
          %s153 = smul.u32 32, %s16
          %s155 = ssub.s32 4096, 4096
          %156 = vsyncadd %s149, %s155
          %s157 = smul.addr %s153, 128
          %s158 = scalar_lea.hbm %s0, %s157
          %s159 = sshll.u32 %s152, 4
          %s160 = int_to_ptr.vmem [resolvable:$true] %s159
          %165 = dma.hbm_to_vmem [thread:$0]  %s158, 4096, %s160, %s149, 128, 128, 8
        $region28: #{tpu_custom_call.1} parent=23 // pred_fallthru
          _
      $region24: #{tpu_custom_call.1} parent=5 // pred_fallthru
        _
      %p166 = scmp.le.s32.totalorder 1, %s16
      %p167 = scmp.lt.s32.totalorder %s16, 3
      %p168 = pnand %p166, %p167
      %p169 = pneg %p168
      // Predicated region
      $region29: #{tpu_custom_call.1} parent=5 // pred_check
        _
      $region30: #{tpu_custom_call.1} parent=5 // pred_check_branch
        %171 = sbr.rel (%p168) target = $region32
      $region31: #{tpu_custom_call.1} parent=5 // pred_region
        %s172 = ssub.s32 %s16, 1
        %s173 = sand.u32 %s29, 1
        %s174 = scalar_lea.sflag [#allocation3], %s173
        %s175 = sand.u32 %s29, 1
        %s176 = smul.addr %s175, 256
        %s177 = scalar_lea.vmem [#allocation2], %s176
        // Predicated region
        $region33: #{tpu_custom_call.1} parent=31 // pred_check
          %p178 = pneg %p42
        $region34: #{tpu_custom_call.1} parent=31 // pred_check_branch
          %180 = sbr.rel (%p178) target = $region36
        $region35: #{tpu_custom_call.1} parent=31 // pred_region
          %181 = dma.done %s174, 4096
        $region36: #{tpu_custom_call.1} parent=31 // pred_fallthru
          _
        // Predicated region
        $region37: #{tpu_custom_call.1} parent=31 // pred_check
          %p182 = pneg %p63
        $region38: #{tpu_custom_call.1} parent=31 // pred_check_branch
          %184 = sbr.rel (%p182) target = $region40
        $region39: #{tpu_custom_call.1} parent=31 // pred_region
          %185 = dma.done [#allocation6], 2048
        $region40: #{tpu_custom_call.1} parent=31 // pred_fallthru
          _
        %s186 = sand.u32 %s29, 1
        %s187 = scalar_lea.sflag [#allocation3], %s186
        %s188 = sand.u32 %s29, 1
        %s189 = smul.addr %s188, 256
        %s190 = scalar_lea.vmem [#allocation2], %s189
        %p191 = pneg %p42
        %p192 = pneg %p39
        %p193 = pneg %p63
        %p194 = pneg %p60
        %p195 = pneg %p84
        %p196 = pneg %p81
        %p197 = pneg %p110
        %p198 = pneg %p107
        %s199 = sand.u32 %s97, 1
        %s200 = scalar_lea.sflag [#allocation4], %s199
        %s201 = sand.u32 %s97, 1
        %s202 = smul.addr %s201, 256
        %s203 = scalar_lea.vmem [#allocation7], %s202
        %s204 = smul.u32 32, %s21
        %s205 = smul.u32 32, %s21
        %v207 = vld [vmem:[%s177] sm:$0xff]
        %v208 = vld [vmem:[%s177 + $0x8] sm:$0xff]
        %v209 = vld [vmem:[%s177 + $0x10] sm:$0xff]
        %v210 = vld [vmem:[%s177 + $0x18] sm:$0xff]
        %v211 = vld [vmem:[%s177 + $0x20] sm:$0xff]
        %v212 = vld [vmem:[%s177 + $0x28] sm:$0xff]
        %v213 = vld [vmem:[%s177 + $0x30] sm:$0xff]
        %v214 = vld [vmem:[%s177 + $0x38] sm:$0xff]
        %v215 = vld [vmem:[%s177 + $0x40] sm:$0xff]
        %v216 = vld [vmem:[%s177 + $0x48] sm:$0xff]
        %v217 = vld [vmem:[%s177 + $0x50] sm:$0xff]
        %v218 = vld [vmem:[%s177 + $0x58] sm:$0xff]
        %v219 = vld [vmem:[%s177 + $0x60] sm:$0xff]
        %v220 = vld [vmem:[%s177 + $0x68] sm:$0xff]
        %v221 = vld [vmem:[%s177 + $0x70] sm:$0xff]
        %v222 = vld [vmem:[%s177 + $0x78] sm:$0xff]
        %v223 = vld [vmem:[%s177 + $0x80] sm:$0xff]
        %v224 = vld [vmem:[%s177 + $0x88] sm:$0xff]
        %v225 = vld [vmem:[%s177 + $0x90] sm:$0xff]
        %v226 = vld [vmem:[%s177 + $0x98] sm:$0xff]
        %v227 = vld [vmem:[%s177 + $0xa0] sm:$0xff]
        %v228 = vld [vmem:[%s177 + $0xa8] sm:$0xff]
        %v229 = vld [vmem:[%s177 + $0xb0] sm:$0xff]
        %v230 = vld [vmem:[%s177 + $0xb8] sm:$0xff]
        %v231 = vld [vmem:[%s177 + $0xc0] sm:$0xff]
        %v232 = vld [vmem:[%s177 + $0xc8] sm:$0xff]
        %v233 = vld [vmem:[%s177 + $0xd0] sm:$0xff]
        %v234 = vld [vmem:[%s177 + $0xd8] sm:$0xff]
        %v235 = vld [vmem:[%s177 + $0xe0] sm:$0xff]
        %v236 = vld [vmem:[%s177 + $0xe8] sm:$0xff]
        %v237 = vld [vmem:[%s177 + $0xf0] sm:$0xff]
        %v238 = vld [vmem:[%s177 + $0xf8] sm:$0xff]
        %v239 = vpack.c.bf16 %v208, %v207
        %v240 = vpack.c.bf16 %v210, %v209
        %v241 = vpack.c.bf16 %v212, %v211
        %v242 = vpack.c.bf16 %v214, %v213
        %v243 = vpack.c.bf16 %v216, %v215
        %v244 = vpack.c.bf16 %v218, %v217
        %v245 = vpack.c.bf16 %v220, %v219
        %v246 = vpack.c.bf16 %v222, %v221
        %v247 = vpack.c.bf16 %v224, %v223
        %v248 = vpack.c.bf16 %v226, %v225
        %v249 = vpack.c.bf16 %v228, %v227
        %v250 = vpack.c.bf16 %v230, %v229
        %v251 = vpack.c.bf16 %v232, %v231
        %v252 = vpack.c.bf16 %v234, %v233
        %v253 = vpack.c.bf16 %v236, %v235
        %v254 = vpack.c.bf16 %v238, %v237
        %v255 = vld [vmem:[#allocation5] sm:$0xff]
        %v256 = vld [vmem:[#allocation5 + $0x8] sm:$0xff]
        %v257 = vld [vmem:[#allocation5 + $0x10] sm:$0xff]
        %v258 = vld [vmem:[#allocation5 + $0x18] sm:$0xff]
        %v259 = vld [vmem:[#allocation5 + $0x20] sm:$0xff]
        %v260 = vld [vmem:[#allocation5 + $0x28] sm:$0xff]
        %v261 = vld [vmem:[#allocation5 + $0x30] sm:$0xff]
        %v262 = vld [vmem:[#allocation5 + $0x38] sm:$0xff]
        %v263 = vld [vmem:[#allocation5 + $0x40] sm:$0xff]
        %v264 = vld [vmem:[#allocation5 + $0x48] sm:$0xff]
        %v265 = vld [vmem:[#allocation5 + $0x50] sm:$0xff]
        %v266 = vld [vmem:[#allocation5 + $0x58] sm:$0xff]
        %v267 = vld [vmem:[#allocation5 + $0x60] sm:$0xff]
        %v268 = vld [vmem:[#allocation5 + $0x68] sm:$0xff]
        %v269 = vld [vmem:[#allocation5 + $0x70] sm:$0xff]
        %v270 = vld [vmem:[#allocation5 + $0x78] sm:$0xff]
        %v271 = vld [vmem:[%s2] sm:$0x3]
        %v273 = vlaneseq
        %v274 = vshrl.u32 %v273, 7
        %v275 = vsub.s32 0, %v274
        %v276 = vrot.slane %v271, %v275
        %v277 = vlaneseq
        %v278 = vshrl.u32 %v277, 7
        %v279 = vsub.s32 1, %v278
        %v280 = vrot.slane %v271, %v279
        %v299 = vunpack.c.l.b16 %v255
        %v300 = vunpack.c.h.b16 %v255
        %v301 = vunpack.c.l.b16 %v256
        %v302 = vunpack.c.h.b16 %v256
        %v303 = vunpack.c.l.b16 %v257
        %v304 = vunpack.c.h.b16 %v257
        %v305 = vunpack.c.l.b16 %v258
        %v306 = vunpack.c.h.b16 %v258
        %v307 = vunpack.c.l.b16 %v259
        %v308 = vunpack.c.h.b16 %v259
        %v309 = vunpack.c.l.b16 %v260
        %v310 = vunpack.c.h.b16 %v260
        %v311 = vunpack.c.l.b16 %v261
        %v312 = vunpack.c.h.b16 %v261
        %v313 = vunpack.c.l.b16 %v262
        %v314 = vunpack.c.h.b16 %v262
        %v315 = vunpack.c.l.b16 %v263
        %v316 = vunpack.c.h.b16 %v263
        %v317 = vunpack.c.l.b16 %v264
        %v318 = vunpack.c.h.b16 %v264
        %v319 = vunpack.c.l.b16 %v265
        %v320 = vunpack.c.h.b16 %v265
        %v321 = vunpack.c.l.b16 %v266
        %v322 = vunpack.c.h.b16 %v266
        %v323 = vunpack.c.l.b16 %v267
        %v324 = vunpack.c.h.b16 %v267
        %v325 = vunpack.c.l.b16 %v268
        %v326 = vunpack.c.h.b16 %v268
        %v327 = vunpack.c.l.b16 %v269
        %v328 = vunpack.c.h.b16 %v269
        %v329 = vunpack.c.l.b16 %v270
        %v330 = vunpack.c.h.b16 %v270
        %v331 = vpack.c.b16 %v301, %v299
        %v332 = vpack.c.b16 %v302, %v300
        %v333 = vpack.c.b16 %v305, %v303
        %v334 = vpack.c.b16 %v306, %v304
        %v335 = vpack.c.b16 %v309, %v307
        %v336 = vpack.c.b16 %v310, %v308
        %v337 = vpack.c.b16 %v313, %v311
        %v338 = vpack.c.b16 %v314, %v312
        %v339 = vpack.c.b16 %v317, %v315
        %v340 = vpack.c.b16 %v318, %v316
        %v341 = vpack.c.b16 %v321, %v319
        %v342 = vpack.c.b16 %v322, %v320
        %v343 = vpack.c.b16 %v325, %v323
        %v344 = vpack.c.b16 %v326, %v324
        %v345 = vpack.c.b16 %v329, %v327
        %v346 = vpack.c.b16 %v330, %v328
        %363 = vmatprep.subr.bf16.mxu0 %v332
        %364 = vmatpush1.bf16.msra.mxu0 %v331
        %365 = vmatprep.subr.bf16.mxu0 %v334
        %366 = vmatpush1.bf16.msra.mxu0 %v333
        %367 = vmatprep.subr.bf16.mxu0 %v336
        %368 = vmatpush1.bf16.msra.mxu0 %v335
        %369 = vmatprep.subr.bf16.mxu0 %v338
        %370 = vmatpush1.bf16.msra.mxu0 %v337
        %371 = vmatprep.subr.bf16.mxu0 %v340
        %372 = vmatpush1.bf16.msra.mxu0 %v339
        %373 = vmatprep.subr.bf16.mxu0 %v342
        %374 = vmatpush1.bf16.msra.mxu0 %v341
        %375 = vmatprep.subr.bf16.mxu0 %v344
        %376 = vmatpush1.bf16.msra.mxu0 %v343
        %377 = vmatprep.subr.bf16.mxu0 %v346
        %378 = vmatpush1.bf16.msra.mxu0 %v345
        %379 = vmatprep.subr.bf16.mxu0 0
        %380 = vmatpush1.bf16.msra.mxu0 0
        %381 = vmatprep.subr.bf16.mxu0 0
        %382 = vmatpush1.bf16.msra.mxu0 0
        %383 = vmatprep.subr.bf16.mxu0 0
        %384 = vmatpush1.bf16.msra.mxu0 0
        %385 = vmatprep.subr.bf16.mxu0 0
        %386 = vmatpush1.bf16.msra.mxu0 0
        %387 = vmatprep.subr.bf16.mxu0 0
        %388 = vmatpush1.bf16.msra.mxu0 0
        %389 = vmatprep.subr.bf16.mxu0 0
        %390 = vmatpush1.bf16.msra.mxu0 0
        %391 = vmatprep.subr.bf16.mxu0 0
        %392 = vmatpush1.bf16.msra.mxu0 0
        %393 = vmatprep.subr.bf16.mxu0 0
        %394 = vmatpush1.bf16.msra.mxu0 0
        %395 = vmatprep.mubr.bf16.mxu0 0
        %396 = vmatmul.mubr.bf16.gmra.mrb[0].mxu0 %v239
        %v397 = vpop.f32.mrb[0].mxu0
        %v398 = vadd.f32 %v276, %v397
        %v399 = vpop.f32.mrb[0].mxu0
        %v400 = vadd.f32 %v280, %v399
        %v401 = vpop.f32.mrb[0].mxu0
        %v402 = vadd.f32 %v276, %v401
        %v403 = vpop.f32.mrb[0].mxu0
        %v404 = vadd.f32 %v280, %v403
        %405 = vmatprep.mubr.bf16.mxu0 0
        %406 = vmatmul.mubr.bf16.gmra.mrb[0].mxu0 %v240
        %v407 = vpop.f32.mrb[0].mxu0
        %v408 = vadd.f32 %v276, %v407
        %v409 = vpop.f32.mrb[0].mxu0
        %v410 = vadd.f32 %v280, %v409
        %v411 = vpop.f32.mrb[0].mxu0
        %v412 = vadd.f32 %v276, %v411
        %v413 = vpop.f32.mrb[0].mxu0
        %v414 = vadd.f32 %v280, %v413
        %415 = vmatprep.mubr.bf16.mxu0 0
        %416 = vmatmul.mubr.bf16.gmra.mrb[0].mxu0 %v241
        %v417 = vpop.f32.mrb[0].mxu0
        %v418 = vadd.f32 %v276, %v417
        %v419 = vpop.f32.mrb[0].mxu0
        %v420 = vadd.f32 %v280, %v419
        %v421 = vpop.f32.mrb[0].mxu0
        %v422 = vadd.f32 %v276, %v421
        %v423 = vpop.f32.mrb[0].mxu0
        %v424 = vadd.f32 %v280, %v423
        %425 = vmatprep.mubr.bf16.mxu0 0
        %426 = vmatmul.mubr.bf16.gmra.mrb[0].mxu0 %v242
        %v427 = vpop.f32.mrb[0].mxu0
        %v428 = vadd.f32 %v276, %v427
        %v429 = vpop.f32.mrb[0].mxu0
        %v430 = vadd.f32 %v280, %v429
        %v431 = vpop.f32.mrb[0].mxu0
        %v432 = vadd.f32 %v276, %v431
        %v433 = vpop.f32.mrb[0].mxu0
        %v434 = vadd.f32 %v280, %v433
        %435 = vmatprep.mubr.bf16.mxu0 0
        %436 = vmatmul.mubr.bf16.gmra.mrb[0].mxu0 %v243
        %v437 = vpop.f32.mrb[0].mxu0
        %v438 = vadd.f32 %v276, %v437
        %v439 = vpop.f32.mrb[0].mxu0
        %v440 = vadd.f32 %v280, %v439
        %v441 = vpop.f32.mrb[0].mxu0
        %v442 = vadd.f32 %v276, %v441
        %v443 = vpop.f32.mrb[0].mxu0
        %v444 = vadd.f32 %v280, %v443
        %445 = vmatprep.mubr.bf16.mxu0 0
        %446 = vmatmul.mubr.bf16.gmra.mrb[0].mxu0 %v244
        %v447 = vpop.f32.mrb[0].mxu0
        %v448 = vadd.f32 %v276, %v447
        %v449 = vpop.f32.mrb[0].mxu0
        %v450 = vadd.f32 %v280, %v449
        %v451 = vpop.f32.mrb[0].mxu0
        %v452 = vadd.f32 %v276, %v451
        %v453 = vpop.f32.mrb[0].mxu0
        %v454 = vadd.f32 %v280, %v453
        %455 = vmatprep.mubr.bf16.mxu0 0
        %456 = vmatmul.mubr.bf16.gmra.mrb[0].mxu0 %v245
        %v457 = vpop.f32.mrb[0].mxu0
        %v458 = vadd.f32 %v276, %v457
        %v459 = vpop.f32.mrb[0].mxu0
        %v460 = vadd.f32 %v280, %v459
        %v461 = vpop.f32.mrb[0].mxu0
        %v462 = vadd.f32 %v276, %v461
        %v463 = vpop.f32.mrb[0].mxu0
        %v464 = vadd.f32 %v280, %v463
        %465 = vmatprep.mubr.bf16.mxu0 0
        %466 = vmatmul.mubr.bf16.gmra.mrb[0].mxu0 %v246
        %v467 = vpop.f32.mrb[0].mxu0
        %v468 = vadd.f32 %v276, %v467
        %v469 = vpop.f32.mrb[0].mxu0
        %v470 = vadd.f32 %v280, %v469
        %v471 = vpop.f32.mrb[0].mxu0
        %v472 = vadd.f32 %v276, %v471
        %v473 = vpop.f32.mrb[0].mxu0
        %v474 = vadd.f32 %v280, %v473
        %475 = vmatprep.mubr.bf16.mxu0 0
        %476 = vmatmul.mubr.bf16.gmra.mrb[0].mxu0 %v247
        %v477 = vpop.f32.mrb[0].mxu0
        %v478 = vadd.f32 %v276, %v477
        %v479 = vpop.f32.mrb[0].mxu0
        %v480 = vadd.f32 %v280, %v479
        %v481 = vpop.f32.mrb[0].mxu0
        %v482 = vadd.f32 %v276, %v481
        %v483 = vpop.f32.mrb[0].mxu0
        %v484 = vadd.f32 %v280, %v483
        %485 = vmatprep.mubr.bf16.mxu0 0
        %486 = vmatmul.mubr.bf16.gmra.mrb[0].mxu0 %v248
        %v487 = vpop.f32.mrb[0].mxu0
        %v488 = vadd.f32 %v276, %v487
        %v489 = vpop.f32.mrb[0].mxu0
        %v490 = vadd.f32 %v280, %v489
        %v491 = vpop.f32.mrb[0].mxu0
        %v492 = vadd.f32 %v276, %v491
        %v493 = vpop.f32.mrb[0].mxu0
        %v494 = vadd.f32 %v280, %v493
        %495 = vmatprep.mubr.bf16.mxu0 0
        %496 = vmatmul.mubr.bf16.gmra.mrb[0].mxu0 %v249
        %v497 = vpop.f32.mrb[0].mxu0
        %v498 = vadd.f32 %v276, %v497
        %v499 = vpop.f32.mrb[0].mxu0
        %v500 = vadd.f32 %v280, %v499
        %v501 = vpop.f32.mrb[0].mxu0
        %v502 = vadd.f32 %v276, %v501
        %v503 = vpop.f32.mrb[0].mxu0
        %v504 = vadd.f32 %v280, %v503
        %505 = vmatprep.mubr.bf16.mxu0 0
        %506 = vmatmul.mubr.bf16.gmra.mrb[0].mxu0 %v250
        %v507 = vpop.f32.mrb[0].mxu0
        %v508 = vadd.f32 %v276, %v507
        %v509 = vpop.f32.mrb[0].mxu0
        %v510 = vadd.f32 %v280, %v509
        %v511 = vpop.f32.mrb[0].mxu0
        %v512 = vadd.f32 %v276, %v511
        %v513 = vpop.f32.mrb[0].mxu0
        %v514 = vadd.f32 %v280, %v513
        %515 = vmatprep.mubr.bf16.mxu0 0
        %516 = vmatmul.mubr.bf16.gmra.mrb[0].mxu0 %v251
        %v517 = vpop.f32.mrb[0].mxu0
        %v518 = vadd.f32 %v276, %v517
        %v519 = vpop.f32.mrb[0].mxu0
        %v520 = vadd.f32 %v280, %v519
        %v521 = vpop.f32.mrb[0].mxu0
        %v522 = vadd.f32 %v276, %v521
        %v523 = vpop.f32.mrb[0].mxu0
        %v524 = vadd.f32 %v280, %v523
        %525 = vmatprep.mubr.bf16.mxu0 0
        %526 = vmatmul.mubr.bf16.gmra.mrb[0].mxu0 %v252
        %v527 = vpop.f32.mrb[0].mxu0
        %v528 = vadd.f32 %v276, %v527
        %v529 = vpop.f32.mrb[0].mxu0
        %v530 = vadd.f32 %v280, %v529
        %v531 = vpop.f32.mrb[0].mxu0
        %v532 = vadd.f32 %v276, %v531
        %v533 = vpop.f32.mrb[0].mxu0
        %v534 = vadd.f32 %v280, %v533
        %535 = vmatprep.mubr.bf16.mxu0 0
        %536 = vmatmul.mubr.bf16.gmra.mrb[0].mxu0 %v253
        %v537 = vpop.f32.mrb[0].mxu0
        %v538 = vadd.f32 %v276, %v537
        %v539 = vpop.f32.mrb[0].mxu0
        %v540 = vadd.f32 %v280, %v539
        %v541 = vpop.f32.mrb[0].mxu0
        %v542 = vadd.f32 %v276, %v541
        %v543 = vpop.f32.mrb[0].mxu0
        %v544 = vadd.f32 %v280, %v543
        %545 = vmatprep.mubr.bf16.mxu0 0
        %546 = vmatmul.mubr.bf16.gmra.mrb[0].mxu0 %v254
        %v547 = vpop.f32.mrb[0].mxu0
        %v548 = vadd.f32 %v276, %v547
        %v549 = vpop.f32.mrb[0].mxu0
        %v550 = vadd.f32 %v280, %v549
        %v551 = vpop.f32.mrb[0].mxu0
        %v552 = vadd.f32 %v276, %v551
        %v553 = vpop.f32.mrb[0].mxu0
        %v554 = vadd.f32 %v280, %v553
        %555 = vdwg.mxu0
        %v556 = vmax.f32 %v398, 0.0
        %v557 = vmax.f32 %v402, 0.0
        %v558 = vmax.f32 %v408, 0.0
        %v559 = vmax.f32 %v412, 0.0
        %v560 = vmax.f32 %v418, 0.0
        %v561 = vmax.f32 %v422, 0.0
        %v562 = vmax.f32 %v428, 0.0
        %v563 = vmax.f32 %v432, 0.0
        %v564 = vmax.f32 %v438, 0.0
        %v565 = vmax.f32 %v442, 0.0
        %v566 = vmax.f32 %v448, 0.0
        %v567 = vmax.f32 %v452, 0.0
        %v568 = vmax.f32 %v458, 0.0
        %v569 = vmax.f32 %v462, 0.0
        %v570 = vmax.f32 %v468, 0.0
        %v571 = vmax.f32 %v472, 0.0
        %v572 = vmax.f32 %v478, 0.0
        %v573 = vmax.f32 %v482, 0.0
        %v574 = vmax.f32 %v488, 0.0
        %v575 = vmax.f32 %v492, 0.0
        %v576 = vmax.f32 %v498, 0.0
        %v577 = vmax.f32 %v502, 0.0
        %v578 = vmax.f32 %v508, 0.0
        %v579 = vmax.f32 %v512, 0.0
        %v580 = vmax.f32 %v518, 0.0
        %v581 = vmax.f32 %v522, 0.0
        %v582 = vmax.f32 %v528, 0.0
        %v583 = vmax.f32 %v532, 0.0
        %v584 = vmax.f32 %v538, 0.0
        %v585 = vmax.f32 %v542, 0.0
        %v586 = vmax.f32 %v548, 0.0
        %v587 = vmax.f32 %v552, 0.0
        %588 = vmax.xlane.f32.xlu0 %v400
        %v589 = vpop.xlane.xlu0 %588
        %590 = vmax.xlane.f32.xlu0 %v404
        %v591 = vpop.xlane.xlu0 %590
        %592 = vmax.xlane.f32.xlu0 %v410
        %v593 = vpop.xlane.xlu0 %592
        %594 = vmax.xlane.f32.xlu0 %v414
        %v595 = vpop.xlane.xlu0 %594
        %596 = vmax.xlane.f32.xlu0 %v420
        %v597 = vpop.xlane.xlu0 %596
        %598 = vmax.xlane.f32.xlu0 %v424
        %v599 = vpop.xlane.xlu0 %598
        %600 = vmax.xlane.f32.xlu0 %v430
        %v601 = vpop.xlane.xlu0 %600
        %602 = vmax.xlane.f32.xlu0 %v434
        %v603 = vpop.xlane.xlu0 %602
        %604 = vmax.xlane.f32.xlu0 %v440
        %v605 = vpop.xlane.xlu0 %604
        %606 = vmax.xlane.f32.xlu0 %v444
        %v607 = vpop.xlane.xlu0 %606
        %608 = vmax.xlane.f32.xlu0 %v450
        %v609 = vpop.xlane.xlu0 %608
        %610 = vmax.xlane.f32.xlu0 %v454
        %v611 = vpop.xlane.xlu0 %610
        %612 = vmax.xlane.f32.xlu0 %v460
        %v613 = vpop.xlane.xlu0 %612
        %614 = vmax.xlane.f32.xlu0 %v464
        %v615 = vpop.xlane.xlu0 %614
        %616 = vmax.xlane.f32.xlu0 %v470
        %v617 = vpop.xlane.xlu0 %616
        %618 = vmax.xlane.f32.xlu0 %v474
        %v619 = vpop.xlane.xlu0 %618
        %620 = vmax.xlane.f32.xlu0 %v480
        %v621 = vpop.xlane.xlu0 %620
        %622 = vmax.xlane.f32.xlu0 %v484
        %v623 = vpop.xlane.xlu0 %622
        %624 = vmax.xlane.f32.xlu0 %v490
        %v625 = vpop.xlane.xlu0 %624
        %626 = vmax.xlane.f32.xlu0 %v494
        %v627 = vpop.xlane.xlu0 %626
        %628 = vmax.xlane.f32.xlu0 %v500
        %v629 = vpop.xlane.xlu0 %628
        %630 = vmax.xlane.f32.xlu0 %v504
        %v631 = vpop.xlane.xlu0 %630
        %632 = vmax.xlane.f32.xlu0 %v510
        %v633 = vpop.xlane.xlu0 %632
        %634 = vmax.xlane.f32.xlu0 %v514
        %v635 = vpop.xlane.xlu0 %634
        %636 = vmax.xlane.f32.xlu0 %v520
        %v637 = vpop.xlane.xlu0 %636
        %638 = vmax.xlane.f32.xlu0 %v524
        %v639 = vpop.xlane.xlu0 %638
        %640 = vmax.xlane.f32.xlu0 %v530
        %v641 = vpop.xlane.xlu0 %640
        %642 = vmax.xlane.f32.xlu0 %v534
        %v643 = vpop.xlane.xlu0 %642
        %644 = vmax.xlane.f32.xlu0 %v540
        %v645 = vpop.xlane.xlu0 %644
        %646 = vmax.xlane.f32.xlu0 %v544
        %v647 = vpop.xlane.xlu0 %646
        %648 = vmax.xlane.f32.xlu0 %v550
        %v649 = vpop.xlane.xlu0 %648
        %650 = vmax.xlane.f32.xlu0 %v554
        %v651 = vpop.xlane.xlu0 %650
        %v652 = vsub.f32 %v400, %v589
        %v653 = vsub.f32 %v404, %v591
        %v654 = vsub.f32 %v410, %v593
        %v655 = vsub.f32 %v414, %v595
        %v656 = vsub.f32 %v420, %v597
        %v657 = vsub.f32 %v424, %v599
        %v658 = vsub.f32 %v430, %v601
        %v659 = vsub.f32 %v434, %v603
        %v660 = vsub.f32 %v440, %v605
        %v661 = vsub.f32 %v444, %v607
        %v662 = vsub.f32 %v450, %v609
        %v663 = vsub.f32 %v454, %v611
        %v664 = vsub.f32 %v460, %v613
        %v665 = vsub.f32 %v464, %v615
        %v666 = vsub.f32 %v470, %v617
        %v667 = vsub.f32 %v474, %v619
        %v668 = vsub.f32 %v480, %v621
        %v669 = vsub.f32 %v484, %v623
        %v670 = vsub.f32 %v490, %v625
        %v671 = vsub.f32 %v494, %v627
        %v672 = vsub.f32 %v500, %v629
        %v673 = vsub.f32 %v504, %v631
        %v674 = vsub.f32 %v510, %v633
        %v675 = vsub.f32 %v514, %v635
        %v676 = vsub.f32 %v520, %v637
        %v677 = vsub.f32 %v524, %v639
        %v678 = vsub.f32 %v530, %v641
        %v679 = vsub.f32 %v534, %v643
        %v680 = vsub.f32 %v540, %v645
        %v681 = vsub.f32 %v544, %v647
        %v682 = vsub.f32 %v550, %v649
        %v683 = vsub.f32 %v554, %v651
        %v684 = vmul.f32 %v652, 1.442695
        %v685 = vpow.pop %v684
        %v686 = vmul.f32 %v653, 1.442695
        %v687 = vpow.pop %v686
        %v688 = vmul.f32 %v654, 1.442695
        %v689 = vpow.pop %v688
        %v690 = vmul.f32 %v655, 1.442695
        %v691 = vpow.pop %v690
        %v692 = vmul.f32 %v656, 1.442695
        %v693 = vpow.pop %v692
        %v694 = vmul.f32 %v657, 1.442695
        %v695 = vpow.pop %v694
        %v696 = vmul.f32 %v658, 1.442695
        %v697 = vpow.pop %v696
        %v698 = vmul.f32 %v659, 1.442695
        %v699 = vpow.pop %v698
        %v700 = vmul.f32 %v660, 1.442695
        %v701 = vpow.pop %v700
        %v702 = vmul.f32 %v661, 1.442695
        %v703 = vpow.pop %v702
        %v704 = vmul.f32 %v662, 1.442695
        %v705 = vpow.pop %v704
        %v706 = vmul.f32 %v663, 1.442695
        %v707 = vpow.pop %v706
        %v708 = vmul.f32 %v664, 1.442695
        %v709 = vpow.pop %v708
        %v710 = vmul.f32 %v665, 1.442695
        %v711 = vpow.pop %v710
        %v712 = vmul.f32 %v666, 1.442695
        %v713 = vpow.pop %v712
        %v714 = vmul.f32 %v667, 1.442695
        %v715 = vpow.pop %v714
        %v716 = vmul.f32 %v668, 1.442695
        %v717 = vpow.pop %v716
        %v718 = vmul.f32 %v669, 1.442695
        %v719 = vpow.pop %v718
        %v720 = vmul.f32 %v670, 1.442695
        %v721 = vpow.pop %v720
        %v722 = vmul.f32 %v671, 1.442695
        %v723 = vpow.pop %v722
        %v724 = vmul.f32 %v672, 1.442695
        %v725 = vpow.pop %v724
        %v726 = vmul.f32 %v673, 1.442695
        %v727 = vpow.pop %v726
        %v728 = vmul.f32 %v674, 1.442695
        %v729 = vpow.pop %v728
        %v730 = vmul.f32 %v675, 1.442695
        %v731 = vpow.pop %v730
        %v732 = vmul.f32 %v676, 1.442695
        %v733 = vpow.pop %v732
        %v734 = vmul.f32 %v677, 1.442695
        %v735 = vpow.pop %v734
        %v736 = vmul.f32 %v678, 1.442695
        %v737 = vpow.pop %v736
        %v738 = vmul.f32 %v679, 1.442695
        %v739 = vpow.pop %v738
        %v740 = vmul.f32 %v680, 1.442695
        %v741 = vpow.pop %v740
        %v742 = vmul.f32 %v681, 1.442695
        %v743 = vpow.pop %v742
        %v744 = vmul.f32 %v682, 1.442695
        %v745 = vpow.pop %v744
        %v746 = vmul.f32 %v683, 1.442695
        %v747 = vpow.pop %v746
        %748 = vadd.xlane.f32.xlu0 %v685
        %v749 = vpop.xlane.xlu0 %748
        %750 = vadd.xlane.f32.xlu0 %v687
        %v751 = vpop.xlane.xlu0 %750
        %752 = vadd.xlane.f32.xlu0 %v689
        %v753 = vpop.xlane.xlu0 %752
        %754 = vadd.xlane.f32.xlu0 %v691
        %v755 = vpop.xlane.xlu0 %754
        %756 = vadd.xlane.f32.xlu0 %v693
        %v757 = vpop.xlane.xlu0 %756
        %758 = vadd.xlane.f32.xlu0 %v695
        %v759 = vpop.xlane.xlu0 %758
        %760 = vadd.xlane.f32.xlu0 %v697
        %v761 = vpop.xlane.xlu0 %760
        %762 = vadd.xlane.f32.xlu0 %v699
        %v763 = vpop.xlane.xlu0 %762
        %764 = vadd.xlane.f32.xlu0 %v701
        %v765 = vpop.xlane.xlu0 %764
        %766 = vadd.xlane.f32.xlu0 %v703
        %v767 = vpop.xlane.xlu0 %766
        %768 = vadd.xlane.f32.xlu0 %v705
        %v769 = vpop.xlane.xlu0 %768
        %770 = vadd.xlane.f32.xlu0 %v707
        %v771 = vpop.xlane.xlu0 %770
        %772 = vadd.xlane.f32.xlu0 %v709
        %v773 = vpop.xlane.xlu0 %772
        %774 = vadd.xlane.f32.xlu0 %v711
        %v775 = vpop.xlane.xlu0 %774
        %776 = vadd.xlane.f32.xlu0 %v713
        %v777 = vpop.xlane.xlu0 %776
        %778 = vadd.xlane.f32.xlu0 %v715
        %v779 = vpop.xlane.xlu0 %778
        %780 = vadd.xlane.f32.xlu0 %v717
        %v781 = vpop.xlane.xlu0 %780
        %782 = vadd.xlane.f32.xlu0 %v719
        %v783 = vpop.xlane.xlu0 %782
        %784 = vadd.xlane.f32.xlu0 %v721
        %v785 = vpop.xlane.xlu0 %784
        %786 = vadd.xlane.f32.xlu0 %v723
        %v787 = vpop.xlane.xlu0 %786
        %788 = vadd.xlane.f32.xlu0 %v725
        %v789 = vpop.xlane.xlu0 %788
        %790 = vadd.xlane.f32.xlu0 %v727
        %v791 = vpop.xlane.xlu0 %790
        %792 = vadd.xlane.f32.xlu0 %v729
        %v793 = vpop.xlane.xlu0 %792
        %794 = vadd.xlane.f32.xlu0 %v731
        %v795 = vpop.xlane.xlu0 %794
        %796 = vadd.xlane.f32.xlu0 %v733
        %v797 = vpop.xlane.xlu0 %796
        %798 = vadd.xlane.f32.xlu0 %v735
        %v799 = vpop.xlane.xlu0 %798
        %800 = vadd.xlane.f32.xlu0 %v737
        %v801 = vpop.xlane.xlu0 %800
        %802 = vadd.xlane.f32.xlu0 %v739
        %v803 = vpop.xlane.xlu0 %802
        %804 = vadd.xlane.f32.xlu0 %v741
        %v805 = vpop.xlane.xlu0 %804
        %806 = vadd.xlane.f32.xlu0 %v743
        %v807 = vpop.xlane.xlu0 %806
        %808 = vadd.xlane.f32.xlu0 %v745
        %v809 = vpop.xlane.xlu0 %808
        %810 = vadd.xlane.f32.xlu0 %v747
        %v811 = vpop.xlane.xlu0 %810
        %v812 = vrcp.pop %v749
        %v813 = vrcp.pop %v751
        %v814 = vrcp.pop %v753
        %v815 = vrcp.pop %v755
        %v816 = vrcp.pop %v757
        %v817 = vrcp.pop %v759
        %v818 = vrcp.pop %v761
        %v819 = vrcp.pop %v763
        %v820 = vrcp.pop %v765
        %v821 = vrcp.pop %v767
        %v822 = vrcp.pop %v769
        %v823 = vrcp.pop %v771
        %v824 = vrcp.pop %v773
        %v825 = vrcp.pop %v775
        %v826 = vrcp.pop %v777
        %v827 = vrcp.pop %v779
        %v828 = vrcp.pop %v781
        %v829 = vrcp.pop %v783
        %v830 = vrcp.pop %v785
        %v831 = vrcp.pop %v787
        %v832 = vrcp.pop %v789
        %v833 = vrcp.pop %v791
        %v834 = vrcp.pop %v793
        %v835 = vrcp.pop %v795
        %v836 = vrcp.pop %v797
        %v837 = vrcp.pop %v799
        %v838 = vrcp.pop %v801
        %v839 = vrcp.pop %v803
        %v840 = vrcp.pop %v805
        %v841 = vrcp.pop %v807
        %v842 = vrcp.pop %v809
        %v843 = vrcp.pop %v811
        %v844 = vmul.f32 %v685, %v812
        %v845 = vmul.f32 %v687, %v813
        %v846 = vmul.f32 %v689, %v814
        %v847 = vmul.f32 %v691, %v815
        %v848 = vmul.f32 %v693, %v816
        %v849 = vmul.f32 %v695, %v817
        %v850 = vmul.f32 %v697, %v818
        %v851 = vmul.f32 %v699, %v819
        %v852 = vmul.f32 %v701, %v820
        %v853 = vmul.f32 %v703, %v821
        %v854 = vmul.f32 %v705, %v822
        %v855 = vmul.f32 %v707, %v823
        %v856 = vmul.f32 %v709, %v824
        %v857 = vmul.f32 %v711, %v825
        %v858 = vmul.f32 %v713, %v826
        %v859 = vmul.f32 %v715, %v827
        %v860 = vmul.f32 %v717, %v828
        %v861 = vmul.f32 %v719, %v829
        %v862 = vmul.f32 %v721, %v830
        %v863 = vmul.f32 %v723, %v831
        %v864 = vmul.f32 %v725, %v832
        %v865 = vmul.f32 %v727, %v833
        %v866 = vmul.f32 %v729, %v834
        %v867 = vmul.f32 %v731, %v835
        %v868 = vmul.f32 %v733, %v836
        %v869 = vmul.f32 %v735, %v837
        %v870 = vmul.f32 %v737, %v838
        %v871 = vmul.f32 %v739, %v839
        %v872 = vmul.f32 %v741, %v840
        %v873 = vmul.f32 %v743, %v841
        %v874 = vmul.f32 %v745, %v842
        %v875 = vmul.f32 %v747, %v843
        %v876 = vsub.f32 %v556, %v207
        %v877 = vsub.f32 %v557, %v208
        %v878 = vsub.f32 %v558, %v209
        %v879 = vsub.f32 %v559, %v210
        %v880 = vsub.f32 %v560, %v211
        %v881 = vsub.f32 %v561, %v212
        %v882 = vsub.f32 %v562, %v213
        %v883 = vsub.f32 %v563, %v214
        %v884 = vsub.f32 %v564, %v215
        %v885 = vsub.f32 %v565, %v216
        %v886 = vsub.f32 %v566, %v217
        %v887 = vsub.f32 %v567, %v218
        %v888 = vsub.f32 %v568, %v219
        %v889 = vsub.f32 %v569, %v220
        %v890 = vsub.f32 %v570, %v221
        %v891 = vsub.f32 %v571, %v222
        %v892 = vsub.f32 %v572, %v223
        %v893 = vsub.f32 %v573, %v224
        %v894 = vsub.f32 %v574, %v225
        %v895 = vsub.f32 %v575, %v226
        %v896 = vsub.f32 %v576, %v227
        %v897 = vsub.f32 %v577, %v228
        %v898 = vsub.f32 %v578, %v229
        %v899 = vsub.f32 %v579, %v230
        %v900 = vsub.f32 %v580, %v231
        %v901 = vsub.f32 %v581, %v232
        %v902 = vsub.f32 %v582, %v233
        %v903 = vsub.f32 %v583, %v234
        %v904 = vsub.f32 %v584, %v235
        %v905 = vsub.f32 %v585, %v236
        %v906 = vsub.f32 %v586, %v237
        %v907 = vsub.f32 %v587, %v238
        %v908 = vmul.f32 %v844, %v876
        %v909 = vmul.f32 %v845, %v877
        %v910 = vmul.f32 %v846, %v878
        %v911 = vmul.f32 %v847, %v879
        %v912 = vmul.f32 %v848, %v880
        %v913 = vmul.f32 %v849, %v881
        %v914 = vmul.f32 %v850, %v882
        %v915 = vmul.f32 %v851, %v883
        %v916 = vmul.f32 %v852, %v884
        %v917 = vmul.f32 %v853, %v885
        %v918 = vmul.f32 %v854, %v886
        %v919 = vmul.f32 %v855, %v887
        %v920 = vmul.f32 %v856, %v888
        %v921 = vmul.f32 %v857, %v889
        %v922 = vmul.f32 %v858, %v890
        %v923 = vmul.f32 %v859, %v891
        %v924 = vmul.f32 %v860, %v892
        %v925 = vmul.f32 %v861, %v893
        %v926 = vmul.f32 %v862, %v894
        %v927 = vmul.f32 %v863, %v895
        %v928 = vmul.f32 %v864, %v896
        %v929 = vmul.f32 %v865, %v897
        %v930 = vmul.f32 %v866, %v898
        %v931 = vmul.f32 %v867, %v899
        %v932 = vmul.f32 %v868, %v900
        %v933 = vmul.f32 %v869, %v901
        %v934 = vmul.f32 %v870, %v902
        %v935 = vmul.f32 %v871, %v903
        %v936 = vmul.f32 %v872, %v904
        %v937 = vmul.f32 %v873, %v905
        %v938 = vmul.f32 %v874, %v906
        %v939 = vmul.f32 %v875, %v907
        %v940 = vadd.f32 %v207, %v908
        %v941 = vadd.f32 %v208, %v909
        %v942 = vadd.f32 %v209, %v910
        %v943 = vadd.f32 %v210, %v911
        %v944 = vadd.f32 %v211, %v912
        %v945 = vadd.f32 %v212, %v913
        %v946 = vadd.f32 %v213, %v914
        %v947 = vadd.f32 %v214, %v915
        %v948 = vadd.f32 %v215, %v916
        %v949 = vadd.f32 %v216, %v917
        %v950 = vadd.f32 %v217, %v918
        %v951 = vadd.f32 %v218, %v919
        %v952 = vadd.f32 %v219, %v920
        %v953 = vadd.f32 %v220, %v921
        %v954 = vadd.f32 %v221, %v922
        %v955 = vadd.f32 %v222, %v923
        %v956 = vadd.f32 %v223, %v924
        %v957 = vadd.f32 %v224, %v925
        %v958 = vadd.f32 %v225, %v926
        %v959 = vadd.f32 %v226, %v927
        %v960 = vadd.f32 %v227, %v928
        %v961 = vadd.f32 %v228, %v929
        %v962 = vadd.f32 %v229, %v930
        %v963 = vadd.f32 %v230, %v931
        %v964 = vadd.f32 %v231, %v932
        %v965 = vadd.f32 %v232, %v933
        %v966 = vadd.f32 %v233, %v934
        %v967 = vadd.f32 %v234, %v935
        %v968 = vadd.f32 %v235, %v936
        %v969 = vadd.f32 %v236, %v937
        %v970 = vadd.f32 %v237, %v938
        %v971 = vadd.f32 %v238, %v939
        %972 = vst [vmem:[%s203] sm:$0xff] %v940
        %973 = vst [vmem:[%s203 + $0x8] sm:$0xff] %v941
        %974 = vst [vmem:[%s203 + $0x10] sm:$0xff] %v942
        %975 = vst [vmem:[%s203 + $0x18] sm:$0xff] %v943
        %976 = vst [vmem:[%s203 + $0x20] sm:$0xff] %v944
        %977 = vst [vmem:[%s203 + $0x28] sm:$0xff] %v945
        %978 = vst [vmem:[%s203 + $0x30] sm:$0xff] %v946
        %979 = vst [vmem:[%s203 + $0x38] sm:$0xff] %v947
        %980 = vst [vmem:[%s203 + $0x40] sm:$0xff] %v948
        %981 = vst [vmem:[%s203 + $0x48] sm:$0xff] %v949
        %982 = vst [vmem:[%s203 + $0x50] sm:$0xff] %v950
        %983 = vst [vmem:[%s203 + $0x58] sm:$0xff] %v951
        %984 = vst [vmem:[%s203 + $0x60] sm:$0xff] %v952
        %985 = vst [vmem:[%s203 + $0x68] sm:$0xff] %v953
        %986 = vst [vmem:[%s203 + $0x70] sm:$0xff] %v954
        %987 = vst [vmem:[%s203 + $0x78] sm:$0xff] %v955
        %988 = vst [vmem:[%s203 + $0x80] sm:$0xff] %v956
        %989 = vst [vmem:[%s203 + $0x88] sm:$0xff] %v957
        %990 = vst [vmem:[%s203 + $0x90] sm:$0xff] %v958
        %991 = vst [vmem:[%s203 + $0x98] sm:$0xff] %v959
        %992 = vst [vmem:[%s203 + $0xa0] sm:$0xff] %v960
        %993 = vst [vmem:[%s203 + $0xa8] sm:$0xff] %v961
        %994 = vst [vmem:[%s203 + $0xb0] sm:$0xff] %v962
        %995 = vst [vmem:[%s203 + $0xb8] sm:$0xff] %v963
        %996 = vst [vmem:[%s203 + $0xc0] sm:$0xff] %v964
        %997 = vst [vmem:[%s203 + $0xc8] sm:$0xff] %v965
        %998 = vst [vmem:[%s203 + $0xd0] sm:$0xff] %v966
        %999 = vst [vmem:[%s203 + $0xd8] sm:$0xff] %v967
        %1000 = vst [vmem:[%s203 + $0xe0] sm:$0xff] %v968
        %1001 = vst [vmem:[%s203 + $0xe8] sm:$0xff] %v969
        %1002 = vst [vmem:[%s203 + $0xf0] sm:$0xff] %v970
        %1003 = vst [vmem:[%s203 + $0xf8] sm:$0xff] %v971
        %s1004 = sand.u32 %s97, 1
        %s1005 = scalar_lea.sflag [#allocation4], %s1004
        %s1006 = sand.u32 %s97, 1
        %s1007 = smul.addr %s1006, 256
        %s1008 = scalar_lea.vmem [#allocation7], %s1007
        // Predicated region
        $region41: #{tpu_custom_call.1} parent=31 // pred_check
          %p1009 = pneg %p107
        $region42: #{tpu_custom_call.1} parent=31 // pred_check_branch
          %1011 = sbr.rel (%p1009) target = $region44
        $region43: #{tpu_custom_call.1} parent=31 // pred_region
          %s1012 = smul.u32 32, %s21
          %s1014 = ssub.s32 4096, 4096
          %1015 = vsyncadd %s1005, %s1014
          %s1016 = smul.addr %s1012, 128
          %s1017 = scalar_lea.hbm %s3, %s1016
          %s1018 = sshll.u32 %s1008, 4
          %s1019 = int_to_ptr.vmem [resolvable:$true] %s1018
          %1024 = dma.vmem_to_hbm [thread:$0]  %s1019, 4096, %s1017, %s1005, 128, 128, 8
        $region44: #{tpu_custom_call.1} parent=31 // pred_fallthru
          _
      $region32: #{tpu_custom_call.1} parent=5 // pred_fallthru
        _
      %p1025 = scmp.le.s32.totalorder 2, %s16
      // Predicated region
      $region45: #{tpu_custom_call.1} parent=5 // pred_check
        %p1026 = pneg %p1025
      $region46: #{tpu_custom_call.1} parent=5 // pred_check_branch
        %1028 = sbr.rel (%p1026) target = $region48
      $region47: #{tpu_custom_call.1} parent=5 // pred_region
        %s1029 = ssub.s32 %s16, 2
        // Predicated region
        $region49: #{tpu_custom_call.1} parent=47 // pred_check
          %p1030 = pneg %p113
        $region50: #{tpu_custom_call.1} parent=47 // pred_check_branch
          %1032 = sbr.rel (%p1030) target = $region52
        $region51: #{tpu_custom_call.1} parent=47 // pred_region
          %s1033 = sand.u32 %s98, 1
          %s1034 = scalar_lea.sflag [#allocation4], %s1033
          %s1035 = sand.u32 %s98, 1
          %s1036 = smul.addr %s1035, 256
          %s1037 = scalar_lea.vmem [#allocation7], %s1036
          %1038 = dma.done %s1034, 4096
        $region52: #{tpu_custom_call.1} parent=47 // pred_fallthru
          _
      $region48: #{tpu_custom_call.1} parent=5 // pred_fallthru
        _
    $region6: #{tpu_custom_call.1} parent=1 // loop_footer
      %s20 = sadd.s32 1, %s16
    $region7: #{tpu_custom_call.1} parent=1 // loop_footer_branch
      %15 = sbr.rel target = $region3
    $region8: #{tpu_custom_call.1} parent=1 // loop_exit
      _
    %1039 = vsyncpa [#allocation3], 1
    %s1040 = scalar_lea.sflag [#allocation3], 1
    %1041 = vsyncpa %s1040, 1
    %1042 = vsyncpa [#allocation6], 1
    %1043 = vsyncpa [#allocation4], 1
    %s1044 = scalar_lea.sflag [#allocation4], 1
    %1045 = vsyncpa %s1044, 1

</llo_original>
